<compile_context>
chip_gen: v7x
topology: tpu7x:2x2x1
jax: 0.10.0
libtpu: 0.0.40
codegen_flags: <defaults>
</compile_context>

<pallas_src>
import functools

import jax
import jax.numpy as jnp
from jax import lax
from jax.experimental import pallas as pl
from jax.experimental.pallas import tpu as pltpu


def _round_up(n, m):
    return ((n + m - 1) // m) * m


def _mlp_kernel(x_ref,
                w1_ref, b1_ref,
                w2_ref, b2_ref,
                w3_ref, b3_ref,
                w4_ref, b4_ref,
                w5_ref, b5_ref,
                o_ref):
    """Fused 5-layer MLP, feature-major: (Linear + ReLU) x 4 -> Linear -> Sigmoid.

    x_ref:   (D, tile)   input block, batch on lanes (bf16 or f32).
    wk_ref:  (out, in)   torch-native weights (bf16 or f32, VMEM resident).
    bk_ref:  (out, 1)    biases, f32 (VMEM resident).
    o_ref:   (1, tile)   lane-dense output row, f32.
    """
    # feat-major contraction: (out, in) x (in, tile) -> (out, tile)
    dn = (((1,), (0,)), ((), ()))

    x = x_ref[...]

    # Layer 1: D -> 32, ReLU    (Dropout(0.2) == identity at inference)
    h = lax.dot_general(w1_ref[...], x, dn, preferred_element_type=jnp.float32)
    h = jnp.maximum(h + b1_ref[...], 0.0)

    # Layer 2: 32 -> 64, ReLU   (Dropout(0.3) == identity)
    h = lax.dot_general(w2_ref[...], h.astype(w2_ref.dtype), dn,
                        preferred_element_type=jnp.float32)
    h = jnp.maximum(h + b2_ref[...], 0.0)

    # Layer 3: 64 -> 128, ReLU  (Dropout(0.3) == identity)
    h = lax.dot_general(w3_ref[...], h.astype(w3_ref.dtype), dn,
                        preferred_element_type=jnp.float32)
    h = jnp.maximum(h + b3_ref[...], 0.0)

    # Layer 4: 128 -> 128, ReLU (Dropout(0.2) == identity)
    h = lax.dot_general(w4_ref[...], h.astype(w4_ref.dtype), dn,
                        preferred_element_type=jnp.float32)
    h = jnp.maximum(h + b4_ref[...], 0.0)

    # Layer 5: 128 -> 1.  (1,128) x (128,tile) -> (1,tile), already lane-dense.
    logits = lax.dot_general(w5_ref[...], h.astype(w5_ref.dtype), dn,
                             preferred_element_type=jnp.float32) + b5_ref[...]

    # Exact sigmoid: exp on the EUP, exact divide (VALU has slack; stays in [0,1]).
    o_ref[...] = (1.0 / (1.0 + jnp.exp(-logits))).astype(o_ref.dtype)


def init_params(key, input_dim):
    """Deterministic init mimicking torch.nn.Linear defaults
    (uniform(-1/sqrt(fan_in), 1/sqrt(fan_in))).

    All weights are stored torch-native (out, in); biases are stored (out, 1)
    so the feature-major kernel can broadcast them over the lane (batch) axis.
    """
    dims = [input_dim, 32, 64, 128, 128, 1]
    params = []
    for i in range(5):
        fan_in, fan_out = dims[i], dims[i + 1]
        key, kw, kb = jax.random.split(key, 3)
        bound = 1.0 / (fan_in ** 0.5)
        w = jax.random.uniform(kw, (fan_out, fan_in), jnp.float32, -bound, bound)
        b = jax.random.uniform(kb, (fan_out, 1), jnp.float32, -bound, bound)
        params += [w, b]
    return params


@functools.partial(jax.jit, static_argnames=("batch_tile", "use_bf16"))
def dnn_model2_forward(x, params, *, batch_tile=2048, use_bf16=True):
    """Forward pass.  Output shape (B, 1), f32.

    batch_tile: target rows per grid step (rounded to a multiple of 128).
    The per-step VMEM working set is only ~1-3 MiB (weights + double-buffered
    (D, tile) input + intermediates), so the tile is bounded by per-step
    overhead amortization and megacore balance, not VMEM capacity.  For
    medium/large batches the tile is also capped so the grid has >= 2 steps
    (keeps both v7x TensorCores busy under dimension_semantics=("parallel",)).

    use_bf16: cast x and weights to bf16 for the MXU (f32 accumulation);
    biases / ReLU / sigmoid stay f32.  Validate with ~1e-2 tolerance.
    """
    B, D = x.shape
    b128 = _round_up(B, 128)

    tile = min(_round_up(batch_tile, 128), b128)
    if b128 >= 2 * 128:
        # Keep the grid >= 2 steps (v7x megacore balance); v5e/v6e unaffected.
        tile = min(tile, _round_up(pl.cdiv(b128, 2), 128))
    Bp = _round_up(B, tile)
    num_tiles = Bp // tile

    compute_dtype = jnp.bfloat16 if use_bf16 else jnp.float32
    # Weights to compute dtype (even indices); biases stay f32 (odd indices).
    params = [p.astype(compute_dtype) if i % 2 == 0 else p
              for i, p in enumerate(params)]

    # Lane-dense input: (D, Bp), batch on lanes.  cast+transpose+pad fuse into
    # one HBM pass; padded columns are zeros and get sliced off after the call.
    x_t = x.astype(compute_dtype).T
    if Bp != B:
        x_t = jnp.pad(x_t, ((0, 0), (0, Bp - B)))

    # Weights/biases: whole arrays resident in VMEM, no per-step pipelining.
    weight_spec = pl.BlockSpec(memory_space=pltpu.MemorySpace.VMEM)
    in_specs = [pl.BlockSpec((D, tile), lambda i: (0, i))]
    in_specs += [weight_spec] * len(params)

    flops = 2 * Bp * (D * 32 + 32 * 64 + 64 * 128 + 128 * 128 + 128 * 1)
    bytes_accessed = (Bp * D * jnp.dtype(compute_dtype).itemsize
                      + sum(int(p.size) * jnp.dtype(p.dtype).itemsize for p in params)
                      + 4 * Bp)

    out = pl.pallas_call(
        _mlp_kernel,
        out_shape=jax.ShapeDtypeStruct((1, Bp), jnp.float32),
        grid=(num_tiles,),
        in_specs=in_specs,
        # Lane-dense output: one (1, tile) row block per grid step.
        out_specs=pl.BlockSpec((1, tile), lambda i: (0, i)),
        compiler_params=pltpu.CompilerParams(
            dimension_semantics=("parallel",),
        ),
        cost_estimate=pl.CostEstimate(
            flops=flops, transcendentals=Bp, bytes_accessed=bytes_accessed),
    )(x_t, *params)

    return out[0, :B].reshape(B, 1)


def _reference_forward(x, params):
    """Plain-JAX reference (full-precision matmuls) for correctness checking."""
    w1, b1, w2, b2, w3, b3, w4, b4, w5, b5 = params
    hi = lax.Precision.HIGHEST
    h = jnp.maximum(jnp.dot(x, w1.T, precision=hi) + b1.T, 0.0)
    h = jnp.maximum(jnp.dot(h, w2.T, precision=hi) + b2.T, 0.0)
    h = jnp.maximum(jnp.dot(h, w3.T, precision=hi) + b3.T, 0.0)
    h = jnp.maximum(jnp.dot(h, w4.T, precision=hi) + b4.T, 0.0)
    return jax.nn.sigmoid(jnp.dot(h, w5.T, precision=hi) + b5.T)


if __name__ == "__main__":
    key = jax.random.PRNGKey(0)
    k_x, k_x2, k_p = jax.random.split(key, 3)

    input_dim = 16   # D
    batch = 64       # B (small smoke-test shape)

    x = jax.random.normal(k_x, (batch, input_dim), jnp.float32)
    params = init_params(k_p, input_dim)
    ref = _reference_forward(x, params)

    # 1) f32 path: near-exact vs reference.
    out_f32 = jax.block_until_ready(dnn_model2_forward(x, params, use_bf16=False))
    assert out_f32.shape == (batch, 1)
    assert jnp.allclose(out_f32, ref, atol=5e-4, rtol=5e-4), "mismatch vs reference (f32)"

    # 2) Default bf16-MXU path: relaxed tolerance for bf16 operand rounding.
    out_bf16 = jax.block_until_ready(dnn_model2_forward(x, params))
    assert out_bf16.shape == (batch, 1)
    assert jnp.allclose(out_bf16, ref, atol=2e-2, rtol=2e-2), "mismatch vs reference (bf16)"

    # 3) Ragged batch + multi-tile grid path.
    batch2 = 300
    x2 = jax.random.normal(k_x2, (batch2, input_dim), jnp.float32)
    out2 = jax.block_until_ready(
        dnn_model2_forward(x2, params, batch_tile=128, use_bf16=False))
    ref2 = _reference_forward(x2, params)
    assert out2.shape == (batch2, 1)
    assert jnp.allclose(out2, ref2, atol=5e-4, rtol=5e-4), "mismatch vs reference (ragged)"

    print("KERNEL_OK")
</pallas_src>

<mosaic_0001>
module attributes {stable_mosaic.version = 11 : i64} {
  func.func @_mlp_kernel(%arg0: i32, %arg1: memref<16x128xf32, #tpu.memory_space<vmem>>, %arg2: memref<32x16xf32, #tpu.memory_space<vmem>>, %arg3: memref<32x1xf32, #tpu.memory_space<vmem>>, %arg4: memref<64x32xf32, #tpu.memory_space<vmem>>, %arg5: memref<64x1xf32, #tpu.memory_space<vmem>>, %arg6: memref<128x64xf32, #tpu.memory_space<vmem>>, %arg7: memref<128x1xf32, #tpu.memory_space<vmem>>, %arg8: memref<128x128xf32, #tpu.memory_space<vmem>>, %arg9: memref<128x1xf32, #tpu.memory_space<vmem>>, %arg10: memref<1x128xf32, #tpu.memory_space<vmem>>, %arg11: memref<1x1xf32, #tpu.memory_space<vmem>>, %arg12: memref<1x128xf32, #tpu.memory_space<vmem>>) attributes {dimension_semantics = [#tpu.dimension_semantics<parallel>], iteration_bounds = array<i64: 1>, scalar_prefetch = 0 : i64, scratch_operands = 0 : i64, tpu.core_type = #tpu.core_type<tc>, window_params = [{transform_indices = @transform_0, window_bounds = array<i64: 16, 128>}, {pipeline_mode = #tpu.pipeline_mode<synchronous>, transform_indices = @transform_1, window_bounds = array<i64: 32, 16>}, {pipeline_mode = #tpu.pipeline_mode<synchronous>, transform_indices = @transform_2, window_bounds = array<i64: 32, 1>}, {pipeline_mode = #tpu.pipeline_mode<synchronous>, transform_indices = @transform_3, window_bounds = array<i64: 64, 32>}, {pipeline_mode = #tpu.pipeline_mode<synchronous>, transform_indices = @transform_4, window_bounds = array<i64: 64, 1>}, {pipeline_mode = #tpu.pipeline_mode<synchronous>, transform_indices = @transform_5, window_bounds = array<i64: 128, 64>}, {pipeline_mode = #tpu.pipeline_mode<synchronous>, transform_indices = @transform_6, window_bounds = array<i64: 128, 1>}, {pipeline_mode = #tpu.pipeline_mode<synchronous>, transform_indices = @transform_7, window_bounds = array<i64: 128, 128>}, {pipeline_mode = #tpu.pipeline_mode<synchronous>, transform_indices = @transform_8, window_bounds = array<i64: 128, 1>}, {pipeline_mode = #tpu.pipeline_mode<synchronous>, transform_indices = @transform_9, window_bounds = array<i64: 1, 128>}, {pipeline_mode = #tpu.pipeline_mode<synchronous>, transform_indices = @transform_10, window_bounds = array<i64: 1, 1>}, {transform_indices = @transform_11, window_bounds = array<i64: 1, 128>}]} {
    %c0 = arith.constant 0 : index
    %c0_0 = arith.constant 0 : index
    %0 = vector.load %arg1[%c0, %c0_0] : memref<16x128xf32, #tpu.memory_space<vmem>>, vector<16x128xf32>
    %c0_1 = arith.constant 0 : index
    %c0_2 = arith.constant 0 : index
    %1 = vector.load %arg2[%c0_1, %c0_2] : memref<32x16xf32, #tpu.memory_space<vmem>>, vector<32x16xf32>
    %cst = arith.constant dense<0.000000e+00> : vector<32x128xf32>
    %2 = tpu.matmul %1, %0, %cst {dimension_numbers = #tpu.dot_dimension_numbers<[1], [0], [0], [1], [0, 0, 1, 1], [], []>} : vector<32x16xf32>, vector<16x128xf32>, vector<32x128xf32> -> vector<32x128xf32>
    %c0_3 = arith.constant 0 : index
    %c0_4 = arith.constant 0 : index
    %3 = vector.load %arg3[%c0_3, %c0_4] : memref<32x1xf32, #tpu.memory_space<vmem>>, vector<32x1xf32>
    %4 = vector.broadcast %3 : vector<32x1xf32> to vector<32x128xf32>
    %5 = arith.addf %2, %4 : vector<32x128xf32>
    %cst_5 = arith.constant 0.000000e+00 : f32
    %6 = vector.broadcast %cst_5 : f32 to vector<32x128xf32>
    %7 = arith.maximumf %5, %6 : vector<32x128xf32>
    %c0_6 = arith.constant 0 : index
    %c0_7 = arith.constant 0 : index
    %8 = vector.load %arg4[%c0_6, %c0_7] : memref<64x32xf32, #tpu.memory_space<vmem>>, vector<64x32xf32>
    %cst_8 = arith.constant dense<0.000000e+00> : vector<64x128xf32>
    %9 = tpu.matmul %8, %7, %cst_8 {dimension_numbers = #tpu.dot_dimension_numbers<[1], [0], [0], [1], [0, 0, 1, 1], [], []>} : vector<64x32xf32>, vector<32x128xf32>, vector<64x128xf32> -> vector<64x128xf32>
    %c0_9 = arith.constant 0 : index
    %c0_10 = arith.constant 0 : index
    %10 = vector.load %arg5[%c0_9, %c0_10] : memref<64x1xf32, #tpu.memory_space<vmem>>, vector<64x1xf32>
    %11 = vector.broadcast %10 : vector<64x1xf32> to vector<64x128xf32>
    %12 = arith.addf %9, %11 : vector<64x128xf32>
    %cst_11 = arith.constant 0.000000e+00 : f32
    %13 = vector.broadcast %cst_11 : f32 to vector<64x128xf32>
    %14 = arith.maximumf %12, %13 : vector<64x128xf32>
    %c0_12 = arith.constant 0 : index
    %c0_13 = arith.constant 0 : index
    %15 = vector.load %arg6[%c0_12, %c0_13] : memref<128x64xf32, #tpu.memory_space<vmem>>, vector<128x64xf32>
    %cst_14 = arith.constant dense<0.000000e+00> : vector<128x128xf32>
    %16 = tpu.matmul %15, %14, %cst_14 {dimension_numbers = #tpu.dot_dimension_numbers<[1], [0], [0], [1], [0, 0, 1, 1], [], []>} : vector<128x64xf32>, vector<64x128xf32>, vector<128x128xf32> -> vector<128x128xf32>
    %c0_15 = arith.constant 0 : index
    %c0_16 = arith.constant 0 : index
    %17 = vector.load %arg7[%c0_15, %c0_16] : memref<128x1xf32, #tpu.memory_space<vmem>>, vector<128x1xf32>
    %18 = vector.broadcast %17 : vector<128x1xf32> to vector<128x128xf32>
    %19 = arith.addf %16, %18 : vector<128x128xf32>
    %cst_17 = arith.constant 0.000000e+00 : f32
    %20 = vector.broadcast %cst_17 : f32 to vector<128x128xf32>
    %21 = arith.maximumf %19, %20 : vector<128x128xf32>
    %c0_18 = arith.constant 0 : index
    %c0_19 = arith.constant 0 : index
    %22 = vector.load %arg8[%c0_18, %c0_19] : memref<128x128xf32, #tpu.memory_space<vmem>>, vector<128x128xf32>
    %cst_20 = arith.constant dense<0.000000e+00> : vector<128x128xf32>
    %23 = tpu.matmul %22, %21, %cst_20 {dimension_numbers = #tpu.dot_dimension_numbers<[1], [0], [0], [1], [0, 0, 1, 1], [], []>} : vector<128x128xf32>, vector<128x128xf32>, vector<128x128xf32> -> vector<128x128xf32>
    %c0_21 = arith.constant 0 : index
    %c0_22 = arith.constant 0 : index
    %24 = vector.load %arg9[%c0_21, %c0_22] : memref<128x1xf32, #tpu.memory_space<vmem>>, vector<128x1xf32>
    %25 = vector.broadcast %24 : vector<128x1xf32> to vector<128x128xf32>
    %26 = arith.addf %23, %25 : vector<128x128xf32>
    %cst_23 = arith.constant 0.000000e+00 : f32
    %27 = vector.broadcast %cst_23 : f32 to vector<128x128xf32>
    %28 = arith.maximumf %26, %27 : vector<128x128xf32>
    %c0_24 = arith.constant 0 : index
    %c0_25 = arith.constant 0 : index
    %29 = vector.load %arg10[%c0_24, %c0_25] : memref<1x128xf32, #tpu.memory_space<vmem>>, vector<1x128xf32>
    %cst_26 = arith.constant dense<0.000000e+00> : vector<1x128xf32>
    %30 = tpu.matmul %29, %28, %cst_26 {dimension_numbers = #tpu.dot_dimension_numbers<[1], [0], [0], [1], [0, 0, 1, 1], [], []>} : vector<1x128xf32>, vector<128x128xf32>, vector<1x128xf32> -> vector<1x128xf32>
    %c0_27 = arith.constant 0 : index
    %c0_28 = arith.constant 0 : index
    %31 = vector.load %arg11[%c0_27, %c0_28] : memref<1x1xf32, #tpu.memory_space<vmem>>, vector<1x1xf32>
    %32 = vector.broadcast %31 : vector<1x1xf32> to vector<1x128xf32>
    %33 = arith.addf %30, %32 : vector<1x128xf32>
    %cst_29 = arith.constant 0.000000e+00 : f32
    %34 = vector.broadcast %cst_29 : f32 to vector<1x128xf32>
    %35 = arith.subf %34, %33 : vector<1x128xf32>
    %36 = math.exp %35 : vector<1x128xf32>
    %cst_30 = arith.constant 1.000000e+00 : f32
    %37 = vector.broadcast %cst_30 : f32 to vector<1x128xf32>
    %38 = arith.addf %37, %36 : vector<1x128xf32>
    %cst_31 = arith.constant 1.000000e+00 : f32
    %39 = vector.broadcast %cst_31 : f32 to vector<1x128xf32>
    %40 = arith.divf %39, %38 : vector<1x128xf32>
    %c0_32 = arith.constant 0 : index
    %c0_33 = arith.constant 0 : index
    %41 = vector.load %arg12[%c0_32, %c0_33] : memref<1x128xf32, #tpu.memory_space<vmem>>, vector<1x128xf32>
    tpu.vector_store %arg12[%c0_32, %c0_33], %40 {strides = array<i32>} : memref<1x128xf32, #tpu.memory_space<vmem>>, vector<1x128xf32>,
    return
  }
  func.func @transform_0(%arg0: i32) -> (i32, i32) {
    %c0_i32 = arith.constant 0 : i32
    %c0_i32_0 = arith.constant 0 : i32
    return %c0_i32, %arg0 : i32, i32
  }
  func.func @transform_1(%arg0: i32) -> (i32, i32) {
    %c0_i32 = arith.constant 0 : i32
    %c0_i32_0 = arith.constant 0 : i32
    %c0_i32_1 = arith.constant 0 : i32
    return %c0_i32, %c0_i32_0 : i32, i32
  }
  func.func @transform_2(%arg0: i32) -> (i32, i32) {
    %c0_i32 = arith.constant 0 : i32
    %c0_i32_0 = arith.constant 0 : i32
    %c0_i32_1 = arith.constant 0 : i32
    return %c0_i32, %c0_i32_0 : i32, i32
  }
  func.func @transform_3(%arg0: i32) -> (i32, i32) {
    %c0_i32 = arith.constant 0 : i32
    %c0_i32_0 = arith.constant 0 : i32
    %c0_i32_1 = arith.constant 0 : i32
    return %c0_i32, %c0_i32_0 : i32, i32
  }
  func.func @transform_4(%arg0: i32) -> (i32, i32) {
    %c0_i32 = arith.constant 0 : i32
    %c0_i32_0 = arith.constant 0 : i32
    %c0_i32_1 = arith.constant 0 : i32
    return %c0_i32, %c0_i32_0 : i32, i32
  }
  func.func @transform_5(%arg0: i32) -> (i32, i32) {
    %c0_i32 = arith.constant 0 : i32
    %c0_i32_0 = arith.constant 0 : i32
    %c0_i32_1 = arith.constant 0 : i32
    return %c0_i32, %c0_i32_0 : i32, i32
  }
  func.func @transform_6(%arg0: i32) -> (i32, i32) {
    %c0_i32 = arith.constant 0 : i32
    %c0_i32_0 = arith.constant 0 : i32
    %c0_i32_1 = arith.constant 0 : i32
    return %c0_i32, %c0_i32_0 : i32, i32
  }
  func.func @transform_7(%arg0: i32) -> (i32, i32) {
    %c0_i32 = arith.constant 0 : i32
    %c0_i32_0 = arith.constant 0 : i32
    %c0_i32_1 = arith.constant 0 : i32
    return %c0_i32, %c0_i32_0 : i32, i32
  }
  func.func @transform_8(%arg0: i32) -> (i32, i32) {
    %c0_i32 = arith.constant 0 : i32
    %c0_i32_0 = arith.constant 0 : i32
    %c0_i32_1 = arith.constant 0 : i32
    return %c0_i32, %c0_i32_0 : i32, i32
  }
  func.func @transform_9(%arg0: i32) -> (i32, i32) {
    %c0_i32 = arith.constant 0 : i32
    %c0_i32_0 = arith.constant 0 : i32
    %c0_i32_1 = arith.constant 0 : i32
    return %c0_i32, %c0_i32_0 : i32, i32
  }
  func.func @transform_10(%arg0: i32) -> (i32, i32) {
    %c0_i32 = arith.constant 0 : i32
    %c0_i32_0 = arith.constant 0 : i32
    %c0_i32_1 = arith.constant 0 : i32
    return %c0_i32, %c0_i32_0 : i32, i32
  }
  func.func @transform_11(%arg0: i32) -> (i32, i32) {
    %c0_i32 = arith.constant 0 : i32
    %c0_i32_0 = arith.constant 0 : i32
    return %c0_i32, %arg0 : i32, i32
  }
}

</mosaic_0001>

<llo_original>
// kernel: dnn_model2_forward.1
$region0: #{dnn_model2_forward.1}
  #allocation0 [shape = 'u32[]', space=smem, size = 0x4, offset = 0x4, fixed_abs, tag = 'smem constant byte address 0x4 - core index']
  #allocation1 [shape = 'u32[144,128]{1,0:T(1,128)}', space=vmem, size = 0x12000, scoped, tag = 'internal scratch']
  #allocation2 [shape = 'f32[1,1]{1,0:T(1,128)S(1)}', space=vmem, size = 0x200, scoped, tag = 'scoped memory for dnn_model2_forward.1']
  %s0 = inlined_call_operand.vmem [shape: f32[16,128], index: 0, kind: input, shape index: {}]
  %s1 = inlined_call_operand.vmem [shape: f32[32,16], index: 1, kind: input, shape index: {}]
  %s2 = inlined_call_operand.vmem [shape: f32[32,1], index: 2, kind: input, shape index: {}]
  %s3 = inlined_call_operand.vmem [shape: f32[64,32], index: 3, kind: input, shape index: {}]
  %s4 = inlined_call_operand.vmem [shape: f32[64,1], index: 4, kind: input, shape index: {}]
  %s5 = inlined_call_operand.vmem [shape: f32[128,64], index: 5, kind: input, shape index: {}]
  %s6 = inlined_call_operand.vmem [shape: f32[128,1], index: 6, kind: input, shape index: {}]
  %s7 = inlined_call_operand.vmem [shape: f32[128,128], index: 7, kind: input, shape index: {}]
  %s8 = inlined_call_operand.vmem [shape: f32[128,1], index: 8, kind: input, shape index: {}]
  %s9 = inlined_call_operand.vmem [shape: f32[1,128], index: 9, kind: input, shape index: {}]
  %s10 = inlined_call_operand.<no memory space> [shape: f32[1,1], index: 10, kind: input, shape index: {}]
  %s11 = inlined_call_operand.vmem [shape: f32[1,128], index: 11, kind: output, shape index: {}]
  %s12 = sld [smem:[#allocation0]]
  $region54: #{dnn_model2_forward.1} parent=0
    _
  %s14 = ssub.s32 1, %s12
  %s15 = scalar_select 0, %s14, %s12
  %v16 = vstv %s10
  %17 = vst [vmem:[#allocation2] sm:$0x1] %v16
  // Predicated region
  $region2: #{dnn_model2_forward.1} parent=0 // pred_check
    _
  $region3: #{dnn_model2_forward.1} parent=0 // pred_check_branch
    %19 = sbr.rel (0) target = $region5
  $region4: #{dnn_model2_forward.1} parent=0 // pred_region
    _
  $region5: #{dnn_model2_forward.1} parent=0 // pred_fallthru
    _
  // Predicated region
  $region6: #{dnn_model2_forward.1} parent=0 // pred_check
    _
  $region7: #{dnn_model2_forward.1} parent=0 // pred_check_branch
    %21 = sbr.rel (0) target = $region9
  $region8: #{dnn_model2_forward.1} parent=0 // pred_region
    _
  $region9: #{dnn_model2_forward.1} parent=0 // pred_fallthru
    _
  // Predicated region
  $region10: #{dnn_model2_forward.1} parent=0 // pred_check
    _
  $region11: #{dnn_model2_forward.1} parent=0 // pred_check_branch
    %23 = sbr.rel (0) target = $region13
  $region12: #{dnn_model2_forward.1} parent=0 // pred_region
    _
  $region13: #{dnn_model2_forward.1} parent=0 // pred_fallthru
    _
  // Predicated region
  $region14: #{dnn_model2_forward.1} parent=0 // pred_check
    _
  $region15: #{dnn_model2_forward.1} parent=0 // pred_check_branch
    %25 = sbr.rel (0) target = $region17
  $region16: #{dnn_model2_forward.1} parent=0 // pred_region
    _
  $region17: #{dnn_model2_forward.1} parent=0 // pred_fallthru
    _
  // Predicated region
  $region18: #{dnn_model2_forward.1} parent=0 // pred_check
    _
  $region19: #{dnn_model2_forward.1} parent=0 // pred_check_branch
    %27 = sbr.rel (0) target = $region21
  $region20: #{dnn_model2_forward.1} parent=0 // pred_region
    _
  $region21: #{dnn_model2_forward.1} parent=0 // pred_fallthru
    _
  // Predicated region
  $region22: #{dnn_model2_forward.1} parent=0 // pred_check
    _
  $region23: #{dnn_model2_forward.1} parent=0 // pred_check_branch
    %29 = sbr.rel (0) target = $region25
  $region24: #{dnn_model2_forward.1} parent=0 // pred_region
    _
  $region25: #{dnn_model2_forward.1} parent=0 // pred_fallthru
    _
  // Predicated region
  $region26: #{dnn_model2_forward.1} parent=0 // pred_check
    _
  $region27: #{dnn_model2_forward.1} parent=0 // pred_check_branch
    %31 = sbr.rel (0) target = $region29
  $region28: #{dnn_model2_forward.1} parent=0 // pred_region
    _
  $region29: #{dnn_model2_forward.1} parent=0 // pred_fallthru
    _
  // Predicated region
  $region30: #{dnn_model2_forward.1} parent=0 // pred_check
    _
  $region31: #{dnn_model2_forward.1} parent=0 // pred_check_branch
    %33 = sbr.rel (0) target = $region33
  $region32: #{dnn_model2_forward.1} parent=0 // pred_region
    _
  $region33: #{dnn_model2_forward.1} parent=0 // pred_fallthru
    _
  // Predicated region
  $region34: #{dnn_model2_forward.1} parent=0 // pred_check
    _
  $region35: #{dnn_model2_forward.1} parent=0 // pred_check_branch
    %35 = sbr.rel (0) target = $region37
  $region36: #{dnn_model2_forward.1} parent=0 // pred_region
    _
  $region37: #{dnn_model2_forward.1} parent=0 // pred_fallthru
    _
  // Predicated region
  $region38: #{dnn_model2_forward.1} parent=0 // pred_check
    _
  $region39: #{dnn_model2_forward.1} parent=0 // pred_check_branch
    %37 = sbr.rel (0) target = $region41
  $region40: #{dnn_model2_forward.1} parent=0 // pred_region
    _
  $region41: #{dnn_model2_forward.1} parent=0 // pred_fallthru
    _
  // Predicated region
  $region42: #{dnn_model2_forward.1} parent=0 // pred_check
    _
  $region43: #{dnn_model2_forward.1} parent=0 // pred_check_branch
    %39 = sbr.rel (0) target = $region45
  $region44: #{dnn_model2_forward.1} parent=0 // pred_region
    _
  $region45: #{dnn_model2_forward.1} parent=0 // pred_fallthru
    _
  %v40 = vld [vmem:[%s0] sm:$0xff]
  %v41 = vld [vmem:[%s0 + $0x8] sm:$0xff]
  %v42 = vld [vmem:[%s1] sm:$0xff]
  %v43 = vld [vmem:[%s1 + $0x8] sm:$0xff]
  %v44 = vld [vmem:[%s1 + $0x10] sm:$0xff]
  %v45 = vld [vmem:[%s1 + $0x18] sm:$0xff]
  %v46 = vld [vmem:[%s2] sm:$0xff]
  %v47 = vld [vmem:[%s2 + $0x8] sm:$0xff]
  %v48 = vld [vmem:[%s2 + $0x10] sm:$0xff]
  %v49 = vld [vmem:[%s2 + $0x18] sm:$0xff]
  %51 = vset.pattern.permute.xlu0 0
  %52 = vperm.xlu0 %51, %v46
  %v53 = vpop.permute.xlu0 %52
  %56 = vset.pattern.permute.xlu0 0
  %57 = vperm.xlu0 %56, %v47
  %v58 = vpop.permute.xlu0 %57
  %61 = vset.pattern.permute.xlu0 0
  %62 = vperm.xlu0 %61, %v48
  %v63 = vpop.permute.xlu0 %62
  %66 = vset.pattern.permute.xlu0 0
  %67 = vperm.xlu0 %66, %v49
  %v68 = vpop.permute.xlu0 %67
  %vm70 = vcmask 130048
  %v72 = vsel %vm70, %v42, 0
  %v75 = vsel %vm70, %v43, 0
  %v78 = vsel %vm70, %v44, 0
  %v81 = vsel %vm70, %v45, 0
  %83 = vmatprep.subr.mxu0 0.0
  %84 = vmatpush1.msra.mxu0 %v40
  %85 = vmatprep.subr.mxu0 0.0
  %86 = vmatpush1.msra.mxu0 %v41
  %87 = vmatprep.subr.mxu0 0.0
  %88 = vmatpush1.msra.mxu0 0.0
  %89 = vmatprep.subr.mxu0 0.0
  %90 = vmatpush1.msra.mxu0 0.0
  %91 = vmatprep.subr.mxu0 0.0
  %92 = vmatpush1.msra.mxu0 0.0
  %93 = vmatprep.subr.mxu0 0.0
  %94 = vmatpush1.msra.mxu0 0.0
  %95 = vmatprep.subr.mxu0 0.0
  %96 = vmatpush1.msra.mxu0 0.0
  %97 = vmatprep.subr.mxu0 0.0
  %98 = vmatpush1.msra.mxu0 0.0
  %99 = vmatprep.subr.mxu0 0.0
  %100 = vmatpush1.msra.mxu0 0.0
  %101 = vmatprep.subr.mxu0 0.0
  %102 = vmatpush1.msra.mxu0 0.0
  %103 = vmatprep.subr.mxu0 0.0
  %104 = vmatpush1.msra.mxu0 0.0
  %105 = vmatprep.subr.mxu0 0.0
  %106 = vmatpush1.msra.mxu0 0.0
  %107 = vmatprep.subr.mxu0 0.0
  %108 = vmatpush1.msra.mxu0 0.0
  %109 = vmatprep.subr.mxu0 0.0
  %110 = vmatpush1.msra.mxu0 0.0
  %111 = vmatprep.subr.mxu0 0.0
  %112 = vmatpush1.msra.mxu0 0.0
  %113 = vmatprep.subr.mxu0 0.0
  %114 = vmatpush1.msra.mxu0 0.0
  %115 = vmatprep.subr.mxu0 0.0
  %116 = vmatpush1.msra.mxu0 0.0
  %117 = vmatprep.subr.mxu0 0.0
  %118 = vmatpush1.msra.mxu0 0.0
  %119 = vmatprep.subr.mxu0 0.0
  %120 = vmatpush1.msra.mxu0 0.0
  %121 = vmatprep.subr.mxu0 0.0
  %122 = vmatpush1.msra.mxu0 0.0
  %123 = vmatprep.subr.mxu0 0.0
  %124 = vmatpush1.msra.mxu0 0.0
  %125 = vmatprep.subr.mxu0 0.0
  %126 = vmatpush1.msra.mxu0 0.0
  %127 = vmatprep.subr.mxu0 0.0
  %128 = vmatpush1.msra.mxu0 0.0
  %129 = vmatprep.subr.mxu0 0.0
  %130 = vmatpush1.msra.mxu0 0.0
  %131 = vmatprep.subr.mxu0 0.0
  %132 = vmatpush1.msra.mxu0 0.0
  %133 = vmatprep.subr.mxu0 0.0
  %134 = vmatpush1.msra.mxu0 0.0
  %135 = vmatprep.subr.mxu0 0.0
  %136 = vmatpush1.msra.mxu0 0.0
  %137 = vmatprep.subr.mxu0 0.0
  %138 = vmatpush1.msra.mxu0 0.0
  %139 = vmatprep.subr.mxu0 0.0
  %140 = vmatpush1.msra.mxu0 0.0
  %141 = vmatprep.subr.mxu0 0.0
  %142 = vmatpush1.msra.mxu0 0.0
  %143 = vmatprep.subr.mxu0 0.0
  %144 = vmatpush1.msra.mxu0 0.0
  %145 = vmatprep.subr.mxu0 0.0
  %146 = vmatpush1.msra.mxu0 0.0
  %147 = vmatprep.mubr.f32.mxu0 0.0
  %148 = vmatmul.mubr.f32.gmra.mrb[0].mxu0 %v72
  %v149 = vpop.f32.mrb[0].mxu0
  %v150 = vadd.f32 %v53, %v149
  %v151 = vpop.f32.mrb[0].mxu0
  %152 = vmatprep.mubr.f32.mxu0 0.0
  %153 = vmatmul.mubr.f32.gmra.mrb[0].mxu0 %v75
  %v154 = vpop.f32.mrb[0].mxu0
  %v155 = vadd.f32 %v58, %v154
  %v156 = vpop.f32.mrb[0].mxu0
  %157 = vmatprep.mubr.f32.mxu0 0.0
  %158 = vmatmul.mubr.f32.gmra.mrb[0].mxu0 %v78
  %v159 = vpop.f32.mrb[0].mxu0
  %v160 = vadd.f32 %v63, %v159
  %v161 = vpop.f32.mrb[0].mxu0
  %162 = vmatprep.mubr.f32.mxu0 0.0
  %163 = vmatmul.mubr.f32.gmra.mrb[0].mxu0 %v81
  %v164 = vpop.f32.mrb[0].mxu0
  %v165 = vadd.f32 %v68, %v164
  %v166 = vpop.f32.mrb[0].mxu0
  %167 = vdwg.mxu0
  %v168 = vmax.f32 %v150, 0.0
  %v169 = vmax.f32 %v155, 0.0
  %v170 = vmax.f32 %v160, 0.0
  %v171 = vmax.f32 %v165, 0.0
  %v172 = vld [vmem:[%s3] sm:$0xff]
  %v173 = vld [vmem:[%s3 + $0x8] sm:$0xff]
  %v174 = vld [vmem:[%s3 + $0x10] sm:$0xff]
  %v175 = vld [vmem:[%s3 + $0x18] sm:$0xff]
  %v176 = vld [vmem:[%s3 + $0x20] sm:$0xff]
  %v177 = vld [vmem:[%s3 + $0x28] sm:$0xff]
  %v178 = vld [vmem:[%s3 + $0x30] sm:$0xff]
  %v179 = vld [vmem:[%s3 + $0x38] sm:$0xff]
  %v180 = vld [vmem:[%s4] sm:$0xff]
  %v181 = vld [vmem:[%s4 + $0x8] sm:$0xff]
  %v182 = vld [vmem:[%s4 + $0x10] sm:$0xff]
  %v183 = vld [vmem:[%s4 + $0x18] sm:$0xff]
  %v184 = vld [vmem:[%s4 + $0x20] sm:$0xff]
  %v185 = vld [vmem:[%s4 + $0x28] sm:$0xff]
  %v186 = vld [vmem:[%s4 + $0x30] sm:$0xff]
  %v187 = vld [vmem:[%s4 + $0x38] sm:$0xff]
  %189 = vset.pattern.permute.xlu0 0
  %190 = vperm.xlu0 %189, %v180
  %v191 = vpop.permute.xlu0 %190
  %194 = vset.pattern.permute.xlu0 0
  %195 = vperm.xlu0 %194, %v181
  %v196 = vpop.permute.xlu0 %195
  %199 = vset.pattern.permute.xlu0 0
  %200 = vperm.xlu0 %199, %v182
  %v201 = vpop.permute.xlu0 %200
  %204 = vset.pattern.permute.xlu0 0
  %205 = vperm.xlu0 %204, %v183
  %v206 = vpop.permute.xlu0 %205
  %209 = vset.pattern.permute.xlu0 0
  %210 = vperm.xlu0 %209, %v184
  %v211 = vpop.permute.xlu0 %210
  %214 = vset.pattern.permute.xlu0 0
  %215 = vperm.xlu0 %214, %v185
  %v216 = vpop.permute.xlu0 %215
  %219 = vset.pattern.permute.xlu0 0
  %220 = vperm.xlu0 %219, %v186
  %v221 = vpop.permute.xlu0 %220
  %224 = vset.pattern.permute.xlu0 0
  %225 = vperm.xlu0 %224, %v187
  %v226 = vpop.permute.xlu0 %225
  %vm228 = vcmask 261120
  %v230 = vsel %vm228, %v172, 0
  %v233 = vsel %vm228, %v173, 0
  %v236 = vsel %vm228, %v174, 0
  %v239 = vsel %vm228, %v175, 0
  %v242 = vsel %vm228, %v176, 0
  %v245 = vsel %vm228, %v177, 0
  %v248 = vsel %vm228, %v178, 0
  %v251 = vsel %vm228, %v179, 0
  %253 = vmatprep.subr.mxu0 0.0
  %254 = vmatpush1.msra.mxu0 %v168
  %255 = vmatprep.subr.mxu0 0.0
  %256 = vmatpush1.msra.mxu0 %v169
  %257 = vmatprep.subr.mxu0 0.0
  %258 = vmatpush1.msra.mxu0 %v170
  %259 = vmatprep.subr.mxu0 0.0
  %260 = vmatpush1.msra.mxu0 %v171
  %261 = vmatprep.subr.mxu0 0.0
  %262 = vmatpush1.msra.mxu0 0.0
  %263 = vmatprep.subr.mxu0 0.0
  %264 = vmatpush1.msra.mxu0 0.0
  %265 = vmatprep.subr.mxu0 0.0
  %266 = vmatpush1.msra.mxu0 0.0
  %267 = vmatprep.subr.mxu0 0.0
  %268 = vmatpush1.msra.mxu0 0.0
  %269 = vmatprep.subr.mxu0 0.0
  %270 = vmatpush1.msra.mxu0 0.0
  %271 = vmatprep.subr.mxu0 0.0
  %272 = vmatpush1.msra.mxu0 0.0
  %273 = vmatprep.subr.mxu0 0.0
  %274 = vmatpush1.msra.mxu0 0.0
  %275 = vmatprep.subr.mxu0 0.0
  %276 = vmatpush1.msra.mxu0 0.0
  %277 = vmatprep.subr.mxu0 0.0
  %278 = vmatpush1.msra.mxu0 0.0
  %279 = vmatprep.subr.mxu0 0.0
  %280 = vmatpush1.msra.mxu0 0.0
  %281 = vmatprep.subr.mxu0 0.0
  %282 = vmatpush1.msra.mxu0 0.0
  %283 = vmatprep.subr.mxu0 0.0
  %284 = vmatpush1.msra.mxu0 0.0
  %285 = vmatprep.subr.mxu0 0.0
  %286 = vmatpush1.msra.mxu0 0.0
  %287 = vmatprep.subr.mxu0 0.0
  %288 = vmatpush1.msra.mxu0 0.0
  %289 = vmatprep.subr.mxu0 0.0
  %290 = vmatpush1.msra.mxu0 0.0
  %291 = vmatprep.subr.mxu0 0.0
  %292 = vmatpush1.msra.mxu0 0.0
  %293 = vmatprep.subr.mxu0 0.0
  %294 = vmatpush1.msra.mxu0 0.0
  %295 = vmatprep.subr.mxu0 0.0
  %296 = vmatpush1.msra.mxu0 0.0
  %297 = vmatprep.subr.mxu0 0.0
  %298 = vmatpush1.msra.mxu0 0.0
  %299 = vmatprep.subr.mxu0 0.0
  %300 = vmatpush1.msra.mxu0 0.0
  %301 = vmatprep.subr.mxu0 0.0
  %302 = vmatpush1.msra.mxu0 0.0
  %303 = vmatprep.subr.mxu0 0.0
  %304 = vmatpush1.msra.mxu0 0.0
  %305 = vmatprep.subr.mxu0 0.0
  %306 = vmatpush1.msra.mxu0 0.0
  %307 = vmatprep.subr.mxu0 0.0
  %308 = vmatpush1.msra.mxu0 0.0
  %309 = vmatprep.subr.mxu0 0.0
  %310 = vmatpush1.msra.mxu0 0.0
  %311 = vmatprep.subr.mxu0 0.0
  %312 = vmatpush1.msra.mxu0 0.0
  %313 = vmatprep.subr.mxu0 0.0
  %314 = vmatpush1.msra.mxu0 0.0
  %315 = vmatprep.subr.mxu0 0.0
  %316 = vmatpush1.msra.mxu0 0.0
  %317 = vmatprep.mubr.f32.mxu0 0.0
  %318 = vmatmul.mubr.f32.gmra.mrb[0].mxu0 %v230
  %v319 = vpop.f32.mrb[0].mxu0
  %v320 = vadd.f32 %v191, %v319
  %v321 = vpop.f32.mrb[0].mxu0
  %322 = vmatprep.mubr.f32.mxu0 0.0
  %323 = vmatmul.mubr.f32.gmra.mrb[0].mxu0 %v233
  %v324 = vpop.f32.mrb[0].mxu0
  %v325 = vadd.f32 %v196, %v324
  %v326 = vpop.f32.mrb[0].mxu0
  %327 = vmatprep.mubr.f32.mxu0 0.0
  %328 = vmatmul.mubr.f32.gmra.mrb[0].mxu0 %v236
  %v329 = vpop.f32.mrb[0].mxu0
  %v330 = vadd.f32 %v201, %v329
  %v331 = vpop.f32.mrb[0].mxu0
  %332 = vmatprep.mubr.f32.mxu0 0.0
  %333 = vmatmul.mubr.f32.gmra.mrb[0].mxu0 %v239
  %v334 = vpop.f32.mrb[0].mxu0
  %v335 = vadd.f32 %v206, %v334
  %v336 = vpop.f32.mrb[0].mxu0
  %337 = vmatprep.mubr.f32.mxu0 0.0
  %338 = vmatmul.mubr.f32.gmra.mrb[0].mxu0 %v242
  %v339 = vpop.f32.mrb[0].mxu0
  %v340 = vadd.f32 %v211, %v339
  %v341 = vpop.f32.mrb[0].mxu0
  %342 = vmatprep.mubr.f32.mxu0 0.0
  %343 = vmatmul.mubr.f32.gmra.mrb[0].mxu0 %v245
  %v344 = vpop.f32.mrb[0].mxu0
  %v345 = vadd.f32 %v216, %v344
  %v346 = vpop.f32.mrb[0].mxu0
  %347 = vmatprep.mubr.f32.mxu0 0.0
  %348 = vmatmul.mubr.f32.gmra.mrb[0].mxu0 %v248
  %v349 = vpop.f32.mrb[0].mxu0
  %v350 = vadd.f32 %v221, %v349
  %v351 = vpop.f32.mrb[0].mxu0
  %352 = vmatprep.mubr.f32.mxu0 0.0
  %353 = vmatmul.mubr.f32.gmra.mrb[0].mxu0 %v251
  %v354 = vpop.f32.mrb[0].mxu0
  %v355 = vadd.f32 %v226, %v354
  %v356 = vpop.f32.mrb[0].mxu0
  %357 = vdwg.mxu0
  %v358 = vmax.f32 %v320, 0.0
  %v359 = vmax.f32 %v325, 0.0
  %v360 = vmax.f32 %v330, 0.0
  %v361 = vmax.f32 %v335, 0.0
  %v362 = vmax.f32 %v340, 0.0
  %v363 = vmax.f32 %v345, 0.0
  %v364 = vmax.f32 %v350, 0.0
  %v365 = vmax.f32 %v355, 0.0
  %v366 = vld [vmem:[%s5] sm:$0xff]
  %v367 = vld [vmem:[%s5 + $0x8] sm:$0xff]
  %v368 = vld [vmem:[%s5 + $0x10] sm:$0xff]
  %v369 = vld [vmem:[%s5 + $0x18] sm:$0xff]
  %v370 = vld [vmem:[%s5 + $0x20] sm:$0xff]
  %v371 = vld [vmem:[%s5 + $0x28] sm:$0xff]
  %v372 = vld [vmem:[%s5 + $0x30] sm:$0xff]
  %v373 = vld [vmem:[%s5 + $0x38] sm:$0xff]
  %v374 = vld [vmem:[%s5 + $0x40] sm:$0xff]
  %v375 = vld [vmem:[%s5 + $0x48] sm:$0xff]
  %v376 = vld [vmem:[%s5 + $0x50] sm:$0xff]
  %v377 = vld [vmem:[%s5 + $0x58] sm:$0xff]
  %v378 = vld [vmem:[%s5 + $0x60] sm:$0xff]
  %v379 = vld [vmem:[%s5 + $0x68] sm:$0xff]
  %v380 = vld [vmem:[%s5 + $0x70] sm:$0xff]
  %v381 = vld [vmem:[%s5 + $0x78] sm:$0xff]
  %v382 = vld [vmem:[%s6] sm:$0xff]
  %v383 = vld [vmem:[%s6 + $0x8] sm:$0xff]
  %v384 = vld [vmem:[%s6 + $0x10] sm:$0xff]
  %v385 = vld [vmem:[%s6 + $0x18] sm:$0xff]
  %v386 = vld [vmem:[%s6 + $0x20] sm:$0xff]
  %v387 = vld [vmem:[%s6 + $0x28] sm:$0xff]
  %v388 = vld [vmem:[%s6 + $0x30] sm:$0xff]
  %v389 = vld [vmem:[%s6 + $0x38] sm:$0xff]
  %v390 = vld [vmem:[%s6 + $0x40] sm:$0xff]
  %v391 = vld [vmem:[%s6 + $0x48] sm:$0xff]
  %v392 = vld [vmem:[%s6 + $0x50] sm:$0xff]
  %v393 = vld [vmem:[%s6 + $0x58] sm:$0xff]
  %v394 = vld [vmem:[%s6 + $0x60] sm:$0xff]
  %v395 = vld [vmem:[%s6 + $0x68] sm:$0xff]
  %v396 = vld [vmem:[%s6 + $0x70] sm:$0xff]
  %v397 = vld [vmem:[%s6 + $0x78] sm:$0xff]
  %399 = vset.pattern.permute.xlu0 0
  %400 = vperm.xlu0 %399, %v382
  %v401 = vpop.permute.xlu0 %400
  %404 = vset.pattern.permute.xlu0 0
  %405 = vperm.xlu0 %404, %v383
  %v406 = vpop.permute.xlu0 %405
  %409 = vset.pattern.permute.xlu0 0
  %410 = vperm.xlu0 %409, %v384
  %v411 = vpop.permute.xlu0 %410
  %414 = vset.pattern.permute.xlu0 0
  %415 = vperm.xlu0 %414, %v385
  %v416 = vpop.permute.xlu0 %415
  %419 = vset.pattern.permute.xlu0 0
  %420 = vperm.xlu0 %419, %v386
  %v421 = vpop.permute.xlu0 %420
  %424 = vset.pattern.permute.xlu0 0
  %425 = vperm.xlu0 %424, %v387
  %v426 = vpop.permute.xlu0 %425
  %429 = vset.pattern.permute.xlu0 0
  %430 = vperm.xlu0 %429, %v388
  %v431 = vpop.permute.xlu0 %430
  %434 = vset.pattern.permute.xlu0 0
  %435 = vperm.xlu0 %434, %v389
  %v436 = vpop.permute.xlu0 %435
  %439 = vset.pattern.permute.xlu0 0
  %440 = vperm.xlu0 %439, %v390
  %v441 = vpop.permute.xlu0 %440
  %444 = vset.pattern.permute.xlu0 0
  %445 = vperm.xlu0 %444, %v391
  %v446 = vpop.permute.xlu0 %445
  %449 = vset.pattern.permute.xlu0 0
  %450 = vperm.xlu0 %449, %v392
  %v451 = vpop.permute.xlu0 %450
  %454 = vset.pattern.permute.xlu0 0
  %455 = vperm.xlu0 %454, %v393
  %v456 = vpop.permute.xlu0 %455
  %459 = vset.pattern.permute.xlu0 0
  %460 = vperm.xlu0 %459, %v394
  %v461 = vpop.permute.xlu0 %460
  %464 = vset.pattern.permute.xlu0 0
  %465 = vperm.xlu0 %464, %v395
  %v466 = vpop.permute.xlu0 %465
  %469 = vset.pattern.permute.xlu0 0
  %470 = vperm.xlu0 %469, %v396
  %v471 = vpop.permute.xlu0 %470
  %474 = vset.pattern.permute.xlu0 0
  %475 = vperm.xlu0 %474, %v397
  %v476 = vpop.permute.xlu0 %475
  %vm478 = vcmask 523264
  %v480 = vsel %vm478, %v366, 0
  %v483 = vsel %vm478, %v367, 0
  %v486 = vsel %vm478, %v368, 0
  %v489 = vsel %vm478, %v369, 0
  %v492 = vsel %vm478, %v370, 0
  %v495 = vsel %vm478, %v371, 0
  %v498 = vsel %vm478, %v372, 0
  %v501 = vsel %vm478, %v373, 0
  %v504 = vsel %vm478, %v374, 0
  %v507 = vsel %vm478, %v375, 0
  %v510 = vsel %vm478, %v376, 0
  %v513 = vsel %vm478, %v377, 0
  %v516 = vsel %vm478, %v378, 0
  %v519 = vsel %vm478, %v379, 0
  %v522 = vsel %vm478, %v380, 0
  %v525 = vsel %vm478, %v381, 0
  %527 = vmatprep.subr.mxu0 0.0
  %528 = vmatpush1.msra.mxu0 %v358
  %529 = vmatprep.subr.mxu0 0.0
  %530 = vmatpush1.msra.mxu0 %v359
  %531 = vmatprep.subr.mxu0 0.0
  %532 = vmatpush1.msra.mxu0 %v360
  %533 = vmatprep.subr.mxu0 0.0
  %534 = vmatpush1.msra.mxu0 %v361
  %535 = vmatprep.subr.mxu0 0.0
  %536 = vmatpush1.msra.mxu0 %v362
  %537 = vmatprep.subr.mxu0 0.0
  %538 = vmatpush1.msra.mxu0 %v363
  %539 = vmatprep.subr.mxu0 0.0
  %540 = vmatpush1.msra.mxu0 %v364
  %541 = vmatprep.subr.mxu0 0.0
  %542 = vmatpush1.msra.mxu0 %v365
  %543 = vmatprep.subr.mxu0 0.0
  %544 = vmatpush1.msra.mxu0 0.0
  %545 = vmatprep.subr.mxu0 0.0
  %546 = vmatpush1.msra.mxu0 0.0
  %547 = vmatprep.subr.mxu0 0.0
  %548 = vmatpush1.msra.mxu0 0.0
  %549 = vmatprep.subr.mxu0 0.0
  %550 = vmatpush1.msra.mxu0 0.0
  %551 = vmatprep.subr.mxu0 0.0
  %552 = vmatpush1.msra.mxu0 0.0
  %553 = vmatprep.subr.mxu0 0.0
  %554 = vmatpush1.msra.mxu0 0.0
  %555 = vmatprep.subr.mxu0 0.0
  %556 = vmatpush1.msra.mxu0 0.0
  %557 = vmatprep.subr.mxu0 0.0
  %558 = vmatpush1.msra.mxu0 0.0
  %559 = vmatprep.subr.mxu0 0.0
  %560 = vmatpush1.msra.mxu0 0.0
  %561 = vmatprep.subr.mxu0 0.0
  %562 = vmatpush1.msra.mxu0 0.0
  %563 = vmatprep.subr.mxu0 0.0
  %564 = vmatpush1.msra.mxu0 0.0
  %565 = vmatprep.subr.mxu0 0.0
  %566 = vmatpush1.msra.mxu0 0.0
  %567 = vmatprep.subr.mxu0 0.0
  %568 = vmatpush1.msra.mxu0 0.0
  %569 = vmatprep.subr.mxu0 0.0
  %570 = vmatpush1.msra.mxu0 0.0
  %571 = vmatprep.subr.mxu0 0.0
  %572 = vmatpush1.msra.mxu0 0.0
  %573 = vmatprep.subr.mxu0 0.0
  %574 = vmatpush1.msra.mxu0 0.0
  %575 = vmatprep.subr.mxu0 0.0
  %576 = vmatpush1.msra.mxu0 0.0
  %577 = vmatprep.subr.mxu0 0.0
  %578 = vmatpush1.msra.mxu0 0.0
  %579 = vmatprep.subr.mxu0 0.0
  %580 = vmatpush1.msra.mxu0 0.0
  %581 = vmatprep.subr.mxu0 0.0
  %582 = vmatpush1.msra.mxu0 0.0
  %583 = vmatprep.subr.mxu0 0.0
  %584 = vmatpush1.msra.mxu0 0.0
  %585 = vmatprep.subr.mxu0 0.0
  %586 = vmatpush1.msra.mxu0 0.0
  %587 = vmatprep.subr.mxu0 0.0
  %588 = vmatpush1.msra.mxu0 0.0
  %589 = vmatprep.subr.mxu0 0.0
  %590 = vmatpush1.msra.mxu0 0.0
  %591 = vmatprep.mubr.f32.mxu0 0.0
  %592 = vmatmul.mubr.f32.gmra.mrb[0].mxu0 %v480
  %v593 = vpop.f32.mrb[0].mxu0
  %v594 = vadd.f32 %v401, %v593
  %v595 = vpop.f32.mrb[0].mxu0
  %596 = vmatprep.mubr.f32.mxu0 0.0
  %597 = vmatmul.mubr.f32.gmra.mrb[0].mxu0 %v483
  %v598 = vpop.f32.mrb[0].mxu0
  %v599 = vadd.f32 %v406, %v598
  %v600 = vpop.f32.mrb[0].mxu0
  %601 = vmatprep.mubr.f32.mxu0 0.0
  %602 = vmatmul.mubr.f32.gmra.mrb[0].mxu0 %v486
  %v603 = vpop.f32.mrb[0].mxu0
  %v604 = vadd.f32 %v411, %v603
  %v605 = vpop.f32.mrb[0].mxu0
  %606 = vmatprep.mubr.f32.mxu0 0.0
  %607 = vmatmul.mubr.f32.gmra.mrb[0].mxu0 %v489
  %v608 = vpop.f32.mrb[0].mxu0
  %v609 = vadd.f32 %v416, %v608
  %v610 = vpop.f32.mrb[0].mxu0
  %611 = vmatprep.mubr.f32.mxu0 0.0
  %612 = vmatmul.mubr.f32.gmra.mrb[0].mxu0 %v492
  %v613 = vpop.f32.mrb[0].mxu0
  %v614 = vadd.f32 %v421, %v613
  %v615 = vpop.f32.mrb[0].mxu0
  %616 = vmatprep.mubr.f32.mxu0 0.0
  %617 = vmatmul.mubr.f32.gmra.mrb[0].mxu0 %v495
  %v618 = vpop.f32.mrb[0].mxu0
  %v619 = vadd.f32 %v426, %v618
  %v620 = vpop.f32.mrb[0].mxu0
  %621 = vmatprep.mubr.f32.mxu0 0.0
  %622 = vmatmul.mubr.f32.gmra.mrb[0].mxu0 %v498
  %v623 = vpop.f32.mrb[0].mxu0
  %v624 = vadd.f32 %v431, %v623
  %v625 = vpop.f32.mrb[0].mxu0
  %626 = vmatprep.mubr.f32.mxu0 0.0
  %627 = vmatmul.mubr.f32.gmra.mrb[0].mxu0 %v501
  %v628 = vpop.f32.mrb[0].mxu0
  %v629 = vadd.f32 %v436, %v628
  %v630 = vpop.f32.mrb[0].mxu0
  %631 = vmatprep.mubr.f32.mxu0 0.0
  %632 = vmatmul.mubr.f32.gmra.mrb[0].mxu0 %v504
  %v633 = vpop.f32.mrb[0].mxu0
  %v634 = vadd.f32 %v441, %v633
  %v635 = vpop.f32.mrb[0].mxu0
  %636 = vmatprep.mubr.f32.mxu0 0.0
  %637 = vmatmul.mubr.f32.gmra.mrb[0].mxu0 %v507
  %v638 = vpop.f32.mrb[0].mxu0
  %v639 = vadd.f32 %v446, %v638
  %v640 = vpop.f32.mrb[0].mxu0
  %641 = vmatprep.mubr.f32.mxu0 0.0
  %642 = vmatmul.mubr.f32.gmra.mrb[0].mxu0 %v510
  %v643 = vpop.f32.mrb[0].mxu0
  %v644 = vadd.f32 %v451, %v643
  %v645 = vpop.f32.mrb[0].mxu0
  %646 = vmatprep.mubr.f32.mxu0 0.0
  %647 = vmatmul.mubr.f32.gmra.mrb[0].mxu0 %v513
  %v648 = vpop.f32.mrb[0].mxu0
  %v649 = vadd.f32 %v456, %v648
  %v650 = vpop.f32.mrb[0].mxu0
  %651 = vmatprep.mubr.f32.mxu0 0.0
  %652 = vmatmul.mubr.f32.gmra.mrb[0].mxu0 %v516
  %v653 = vpop.f32.mrb[0].mxu0
  %v654 = vadd.f32 %v461, %v653
  %v655 = vpop.f32.mrb[0].mxu0
  %656 = vmatprep.mubr.f32.mxu0 0.0
  %657 = vmatmul.mubr.f32.gmra.mrb[0].mxu0 %v519
  %v658 = vpop.f32.mrb[0].mxu0
  %v659 = vadd.f32 %v466, %v658
  %v660 = vpop.f32.mrb[0].mxu0
  %661 = vmatprep.mubr.f32.mxu0 0.0
  %662 = vmatmul.mubr.f32.gmra.mrb[0].mxu0 %v522
  %v663 = vpop.f32.mrb[0].mxu0
  %v664 = vadd.f32 %v471, %v663
  %v665 = vpop.f32.mrb[0].mxu0
  %666 = vmatprep.mubr.f32.mxu0 0.0
  %667 = vmatmul.mubr.f32.gmra.mrb[0].mxu0 %v525
  %v668 = vpop.f32.mrb[0].mxu0
  %v669 = vadd.f32 %v476, %v668
  %v670 = vpop.f32.mrb[0].mxu0
  %671 = vdwg.mxu0
  %v672 = vmax.f32 %v594, 0.0
  %v673 = vmax.f32 %v599, 0.0
  %v674 = vmax.f32 %v604, 0.0
  %v675 = vmax.f32 %v609, 0.0
  %v676 = vmax.f32 %v614, 0.0
  %v677 = vmax.f32 %v619, 0.0
  %v678 = vmax.f32 %v624, 0.0
  %v679 = vmax.f32 %v629, 0.0
  %v680 = vmax.f32 %v634, 0.0
  %v681 = vmax.f32 %v639, 0.0
  %v682 = vmax.f32 %v644, 0.0
  %v683 = vmax.f32 %v649, 0.0
  %v684 = vmax.f32 %v654, 0.0
  %v685 = vmax.f32 %v659, 0.0
  %v686 = vmax.f32 %v664, 0.0
  %v687 = vmax.f32 %v669, 0.0
  %v688 = vld [vmem:[%s7] sm:$0xff]
  %v689 = vld [vmem:[%s7 + $0x8] sm:$0xff]
  %v690 = vld [vmem:[%s7 + $0x10] sm:$0xff]
  %v691 = vld [vmem:[%s7 + $0x18] sm:$0xff]
  %v692 = vld [vmem:[%s7 + $0x20] sm:$0xff]
  %v693 = vld [vmem:[%s7 + $0x28] sm:$0xff]
  %v694 = vld [vmem:[%s7 + $0x30] sm:$0xff]
  %v695 = vld [vmem:[%s7 + $0x38] sm:$0xff]
  %v696 = vld [vmem:[%s7 + $0x40] sm:$0xff]
  %v697 = vld [vmem:[%s7 + $0x48] sm:$0xff]
  %v698 = vld [vmem:[%s7 + $0x50] sm:$0xff]
  %v699 = vld [vmem:[%s7 + $0x58] sm:$0xff]
  %v700 = vld [vmem:[%s7 + $0x60] sm:$0xff]
  %v701 = vld [vmem:[%s7 + $0x68] sm:$0xff]
  %v702 = vld [vmem:[%s7 + $0x70] sm:$0xff]
  %v703 = vld [vmem:[%s7 + $0x78] sm:$0xff]
  %v704 = vld [vmem:[%s8] sm:$0xff]
  %v705 = vld [vmem:[%s8 + $0x8] sm:$0xff]
  %v706 = vld [vmem:[%s8 + $0x10] sm:$0xff]
  %v707 = vld [vmem:[%s8 + $0x18] sm:$0xff]
  %v708 = vld [vmem:[%s8 + $0x20] sm:$0xff]
  %v709 = vld [vmem:[%s8 + $0x28] sm:$0xff]
  %v710 = vld [vmem:[%s8 + $0x30] sm:$0xff]
  %v711 = vld [vmem:[%s8 + $0x38] sm:$0xff]
  %v712 = vld [vmem:[%s8 + $0x40] sm:$0xff]
  %v713 = vld [vmem:[%s8 + $0x48] sm:$0xff]
  %v714 = vld [vmem:[%s8 + $0x50] sm:$0xff]
  %v715 = vld [vmem:[%s8 + $0x58] sm:$0xff]
  %v716 = vld [vmem:[%s8 + $0x60] sm:$0xff]
  %v717 = vld [vmem:[%s8 + $0x68] sm:$0xff]
  %v718 = vld [vmem:[%s8 + $0x70] sm:$0xff]
  %v719 = vld [vmem:[%s8 + $0x78] sm:$0xff]
  %721 = vset.pattern.permute.xlu0 0
  %722 = vperm.xlu0 %721, %v704
  %v723 = vpop.permute.xlu0 %722
  %726 = vset.pattern.permute.xlu0 0
  %727 = vperm.xlu0 %726, %v705
  %v728 = vpop.permute.xlu0 %727
  %731 = vset.pattern.permute.xlu0 0
  %732 = vperm.xlu0 %731, %v706
  %v733 = vpop.permute.xlu0 %732
  %736 = vset.pattern.permute.xlu0 0
  %737 = vperm.xlu0 %736, %v707
  %v738 = vpop.permute.xlu0 %737
  %741 = vset.pattern.permute.xlu0 0
  %742 = vperm.xlu0 %741, %v708
  %v743 = vpop.permute.xlu0 %742
  %746 = vset.pattern.permute.xlu0 0
  %747 = vperm.xlu0 %746, %v709
  %v748 = vpop.permute.xlu0 %747
  %751 = vset.pattern.permute.xlu0 0
  %752 = vperm.xlu0 %751, %v710
  %v753 = vpop.permute.xlu0 %752
  %756 = vset.pattern.permute.xlu0 0
  %757 = vperm.xlu0 %756, %v711
  %v758 = vpop.permute.xlu0 %757
  %761 = vset.pattern.permute.xlu0 0
  %762 = vperm.xlu0 %761, %v712
  %v763 = vpop.permute.xlu0 %762
  %766 = vset.pattern.permute.xlu0 0
  %767 = vperm.xlu0 %766, %v713
  %v768 = vpop.permute.xlu0 %767
  %771 = vset.pattern.permute.xlu0 0
  %772 = vperm.xlu0 %771, %v714
  %v773 = vpop.permute.xlu0 %772
  %776 = vset.pattern.permute.xlu0 0
  %777 = vperm.xlu0 %776, %v715
  %v778 = vpop.permute.xlu0 %777
  %781 = vset.pattern.permute.xlu0 0
  %782 = vperm.xlu0 %781, %v716
  %v783 = vpop.permute.xlu0 %782
  %786 = vset.pattern.permute.xlu0 0
  %787 = vperm.xlu0 %786, %v717
  %v788 = vpop.permute.xlu0 %787
  %791 = vset.pattern.permute.xlu0 0
  %792 = vperm.xlu0 %791, %v718
  %v793 = vpop.permute.xlu0 %792
  %796 = vset.pattern.permute.xlu0 0
  %797 = vperm.xlu0 %796, %v719
  %v798 = vpop.permute.xlu0 %797
  %800 = vmatprep.subr.mxu0 0.0
  %801 = vmatpush1.msra.mxu0 %v672
  %802 = vmatprep.subr.mxu0 0.0
  %803 = vmatpush1.msra.mxu0 %v673
  %804 = vmatprep.subr.mxu0 0.0
  %805 = vmatpush1.msra.mxu0 %v674
  %806 = vmatprep.subr.mxu0 0.0
  %807 = vmatpush1.msra.mxu0 %v675
  %808 = vmatprep.subr.mxu0 0.0
  %809 = vmatpush1.msra.mxu0 %v676
  %810 = vmatprep.subr.mxu0 0.0
  %811 = vmatpush1.msra.mxu0 %v677
  %812 = vmatprep.subr.mxu0 0.0
  %813 = vmatpush1.msra.mxu0 %v678
  %814 = vmatprep.subr.mxu0 0.0
  %815 = vmatpush1.msra.mxu0 %v679
  %816 = vmatprep.subr.mxu0 0.0
  %817 = vmatpush1.msra.mxu0 %v680
  %818 = vmatprep.subr.mxu0 0.0
  %819 = vmatpush1.msra.mxu0 %v681
  %820 = vmatprep.subr.mxu0 0.0
  %821 = vmatpush1.msra.mxu0 %v682
  %822 = vmatprep.subr.mxu0 0.0
  %823 = vmatpush1.msra.mxu0 %v683
  %824 = vmatprep.subr.mxu0 0.0
  %825 = vmatpush1.msra.mxu0 %v684
  %826 = vmatprep.subr.mxu0 0.0
  %827 = vmatpush1.msra.mxu0 %v685
  %828 = vmatprep.subr.mxu0 0.0
  %829 = vmatpush1.msra.mxu0 %v686
  %830 = vmatprep.subr.mxu0 0.0
  %831 = vmatpush1.msra.mxu0 %v687
  %832 = vmatprep.subr.mxu0 0.0
  %833 = vmatpush1.msra.mxu0 0.0
  %834 = vmatprep.subr.mxu0 0.0
  %835 = vmatpush1.msra.mxu0 0.0
  %836 = vmatprep.subr.mxu0 0.0
  %837 = vmatpush1.msra.mxu0 0.0
  %838 = vmatprep.subr.mxu0 0.0
  %839 = vmatpush1.msra.mxu0 0.0
  %840 = vmatprep.subr.mxu0 0.0
  %841 = vmatpush1.msra.mxu0 0.0
  %842 = vmatprep.subr.mxu0 0.0
  %843 = vmatpush1.msra.mxu0 0.0
  %844 = vmatprep.subr.mxu0 0.0
  %845 = vmatpush1.msra.mxu0 0.0
  %846 = vmatprep.subr.mxu0 0.0
  %847 = vmatpush1.msra.mxu0 0.0
  %848 = vmatprep.subr.mxu0 0.0
  %849 = vmatpush1.msra.mxu0 0.0
  %850 = vmatprep.subr.mxu0 0.0
  %851 = vmatpush1.msra.mxu0 0.0
  %852 = vmatprep.subr.mxu0 0.0
  %853 = vmatpush1.msra.mxu0 0.0
  %854 = vmatprep.subr.mxu0 0.0
  %855 = vmatpush1.msra.mxu0 0.0
  %856 = vmatprep.subr.mxu0 0.0
  %857 = vmatpush1.msra.mxu0 0.0
  %858 = vmatprep.subr.mxu0 0.0
  %859 = vmatpush1.msra.mxu0 0.0
  %860 = vmatprep.subr.mxu0 0.0
  %861 = vmatpush1.msra.mxu0 0.0
  %862 = vmatprep.subr.mxu0 0.0
  %863 = vmatpush1.msra.mxu0 0.0
  %864 = vmatprep.mubr.f32.mxu0 0.0
  %865 = vmatmul.mubr.f32.gmra.mrb[0].mxu0 %v688
  %v866 = vpop.f32.mrb[0].mxu0
  %v867 = vadd.f32 %v723, %v866
  %v868 = vpop.f32.mrb[0].mxu0
  %869 = vmatprep.mubr.f32.mxu0 0.0
  %870 = vmatmul.mubr.f32.gmra.mrb[0].mxu0 %v689
  %v871 = vpop.f32.mrb[0].mxu0
  %v872 = vadd.f32 %v728, %v871
  %v873 = vpop.f32.mrb[0].mxu0
  %874 = vmatprep.mubr.f32.mxu0 0.0
  %875 = vmatmul.mubr.f32.gmra.mrb[0].mxu0 %v690
  %v876 = vpop.f32.mrb[0].mxu0
  %v877 = vadd.f32 %v733, %v876
  %v878 = vpop.f32.mrb[0].mxu0
  %879 = vmatprep.mubr.f32.mxu0 0.0
  %880 = vmatmul.mubr.f32.gmra.mrb[0].mxu0 %v691
  %v881 = vpop.f32.mrb[0].mxu0
  %v882 = vadd.f32 %v738, %v881
  %v883 = vpop.f32.mrb[0].mxu0
  %884 = vmatprep.mubr.f32.mxu0 0.0
  %885 = vmatmul.mubr.f32.gmra.mrb[0].mxu0 %v692
  %v886 = vpop.f32.mrb[0].mxu0
  %v887 = vadd.f32 %v743, %v886
  %v888 = vpop.f32.mrb[0].mxu0
  %889 = vmatprep.mubr.f32.mxu0 0.0
  %890 = vmatmul.mubr.f32.gmra.mrb[0].mxu0 %v693
  %v891 = vpop.f32.mrb[0].mxu0
  %v892 = vadd.f32 %v748, %v891
  %v893 = vpop.f32.mrb[0].mxu0
  %894 = vmatprep.mubr.f32.mxu0 0.0
  %895 = vmatmul.mubr.f32.gmra.mrb[0].mxu0 %v694
  %v896 = vpop.f32.mrb[0].mxu0
  %v897 = vadd.f32 %v753, %v896
  %v898 = vpop.f32.mrb[0].mxu0
  %899 = vmatprep.mubr.f32.mxu0 0.0
  %900 = vmatmul.mubr.f32.gmra.mrb[0].mxu0 %v695
  %v901 = vpop.f32.mrb[0].mxu0
  %v902 = vadd.f32 %v758, %v901
  %v903 = vpop.f32.mrb[0].mxu0
  %904 = vmatprep.mubr.f32.mxu0 0.0
  %905 = vmatmul.mubr.f32.gmra.mrb[0].mxu0 %v696
  %v906 = vpop.f32.mrb[0].mxu0
  %v907 = vadd.f32 %v763, %v906
  %v908 = vpop.f32.mrb[0].mxu0
  %909 = vmatprep.mubr.f32.mxu0 0.0
  %910 = vmatmul.mubr.f32.gmra.mrb[0].mxu0 %v697
  %v911 = vpop.f32.mrb[0].mxu0
  %v912 = vadd.f32 %v768, %v911
  %v913 = vpop.f32.mrb[0].mxu0
  %914 = vmatprep.mubr.f32.mxu0 0.0
  %915 = vmatmul.mubr.f32.gmra.mrb[0].mxu0 %v698
  %v916 = vpop.f32.mrb[0].mxu0
  %v917 = vadd.f32 %v773, %v916
  %v918 = vpop.f32.mrb[0].mxu0
  %919 = vmatprep.mubr.f32.mxu0 0.0
  %920 = vmatmul.mubr.f32.gmra.mrb[0].mxu0 %v699
  %v921 = vpop.f32.mrb[0].mxu0
  %v922 = vadd.f32 %v778, %v921
  %v923 = vpop.f32.mrb[0].mxu0
  %924 = vmatprep.mubr.f32.mxu0 0.0
  %925 = vmatmul.mubr.f32.gmra.mrb[0].mxu0 %v700
  %v926 = vpop.f32.mrb[0].mxu0
  %v927 = vadd.f32 %v783, %v926
  %v928 = vpop.f32.mrb[0].mxu0
  %929 = vmatprep.mubr.f32.mxu0 0.0
  %930 = vmatmul.mubr.f32.gmra.mrb[0].mxu0 %v701
  %v931 = vpop.f32.mrb[0].mxu0
  %v932 = vadd.f32 %v788, %v931
  %v933 = vpop.f32.mrb[0].mxu0
  %934 = vmatprep.mubr.f32.mxu0 0.0
  %935 = vmatmul.mubr.f32.gmra.mrb[0].mxu0 %v702
  %v936 = vpop.f32.mrb[0].mxu0
  %v937 = vadd.f32 %v793, %v936
  %v938 = vpop.f32.mrb[0].mxu0
  %939 = vmatprep.mubr.f32.mxu0 0.0
  %940 = vmatmul.mubr.f32.gmra.mrb[0].mxu0 %v703
  %v941 = vpop.f32.mrb[0].mxu0
  %v942 = vadd.f32 %v798, %v941
  %v943 = vpop.f32.mrb[0].mxu0
  %944 = vdwg.mxu0
  %v945 = vmax.f32 %v867, 0.0
  %v946 = vmax.f32 %v872, 0.0
  %v947 = vmax.f32 %v877, 0.0
  %v948 = vmax.f32 %v882, 0.0
  %v949 = vmax.f32 %v887, 0.0
  %v950 = vmax.f32 %v892, 0.0
  %v951 = vmax.f32 %v897, 0.0
  %v952 = vmax.f32 %v902, 0.0
  %v953 = vmax.f32 %v907, 0.0
  %v954 = vmax.f32 %v912, 0.0
  %v955 = vmax.f32 %v917, 0.0
  %v956 = vmax.f32 %v922, 0.0
  %v957 = vmax.f32 %v927, 0.0
  %v958 = vmax.f32 %v932, 0.0
  %v959 = vmax.f32 %v937, 0.0
  %v960 = vmax.f32 %v942, 0.0
  %v961 = vld [vmem:[%s9] sm:$0x1]
  %v962 = vld [vmem:[#allocation2] sm:$0x1]
  %964 = vset.pattern.permute.xlu0 0
  %965 = vperm.xlu0 %964, %v962
  %v966 = vpop.permute.xlu0 %965
  %v968 = vlaneseq
  %v969 = vshrl.u32 %v968, 7
  %v970 = vsub.s32 0, %v969
  %v971 = vrot.slane %v966, %v970
  %972 = vmatprep.subr.mxu0 0.0
  %973 = vmatpush1.msra.mxu0 %v945
  %974 = vmatprep.subr.mxu0 0.0
  %975 = vmatpush1.msra.mxu0 %v946
  %976 = vmatprep.subr.mxu0 0.0
  %977 = vmatpush1.msra.mxu0 %v947
  %978 = vmatprep.subr.mxu0 0.0
  %979 = vmatpush1.msra.mxu0 %v948
  %980 = vmatprep.subr.mxu0 0.0
  %981 = vmatpush1.msra.mxu0 %v949
  %982 = vmatprep.subr.mxu0 0.0
  %983 = vmatpush1.msra.mxu0 %v950
  %984 = vmatprep.subr.mxu0 0.0
  %985 = vmatpush1.msra.mxu0 %v951
  %986 = vmatprep.subr.mxu0 0.0
  %987 = vmatpush1.msra.mxu0 %v952
  %988 = vmatprep.subr.mxu0 0.0
  %989 = vmatpush1.msra.mxu0 %v953
  %990 = vmatprep.subr.mxu0 0.0
  %991 = vmatpush1.msra.mxu0 %v954
  %992 = vmatprep.subr.mxu0 0.0
  %993 = vmatpush1.msra.mxu0 %v955
  %994 = vmatprep.subr.mxu0 0.0
  %995 = vmatpush1.msra.mxu0 %v956
  %996 = vmatprep.subr.mxu0 0.0
  %997 = vmatpush1.msra.mxu0 %v957
  %998 = vmatprep.subr.mxu0 0.0
  %999 = vmatpush1.msra.mxu0 %v958
  %1000 = vmatprep.subr.mxu0 0.0
  %1001 = vmatpush1.msra.mxu0 %v959
  %1002 = vmatprep.subr.mxu0 0.0
  %1003 = vmatpush1.msra.mxu0 %v960
  %1004 = vmatprep.subr.mxu0 0.0
  %1005 = vmatpush1.msra.mxu0 0.0
  %1006 = vmatprep.subr.mxu0 0.0
  %1007 = vmatpush1.msra.mxu0 0.0
  %1008 = vmatprep.subr.mxu0 0.0
  %1009 = vmatpush1.msra.mxu0 0.0
  %1010 = vmatprep.subr.mxu0 0.0
  %1011 = vmatpush1.msra.mxu0 0.0
  %1012 = vmatprep.subr.mxu0 0.0
  %1013 = vmatpush1.msra.mxu0 0.0
  %1014 = vmatprep.subr.mxu0 0.0
  %1015 = vmatpush1.msra.mxu0 0.0
  %1016 = vmatprep.subr.mxu0 0.0
  %1017 = vmatpush1.msra.mxu0 0.0
  %1018 = vmatprep.subr.mxu0 0.0
  %1019 = vmatpush1.msra.mxu0 0.0
  %1020 = vmatprep.subr.mxu0 0.0
  %1021 = vmatpush1.msra.mxu0 0.0
  %1022 = vmatprep.subr.mxu0 0.0
  %1023 = vmatpush1.msra.mxu0 0.0
  %1024 = vmatprep.subr.mxu0 0.0
  %1025 = vmatpush1.msra.mxu0 0.0
  %1026 = vmatprep.subr.mxu0 0.0
  %1027 = vmatpush1.msra.mxu0 0.0
  %1028 = vmatprep.subr.mxu0 0.0
  %1029 = vmatpush1.msra.mxu0 0.0
  %1030 = vmatprep.subr.mxu0 0.0
  %1031 = vmatpush1.msra.mxu0 0.0
  %1032 = vmatprep.subr.mxu0 0.0
  %1033 = vmatpush1.msra.mxu0 0.0
  %1034 = vmatprep.subr.mxu0 0.0
  %1035 = vmatpush1.msra.mxu0 0.0
  %1036 = vmatprep.mubr.f32.mxu0 0.0
  %1037 = vmatmul.mubr.f32.gmra.mrb[0].mxu0 %v961
  %v1038 = vpop.f32.mrb[0].mxu0
  %v1039 = vadd.f32 %v971, %v1038
  %v1040 = vpop.f32.mrb[0].mxu0
  %1041 = vdwg.mxu0
  %v1042 = vsub.f32 0.0, %v1039
  %v1043 = vmul.f32 %v1042, 1.442695
  %v1044 = vpow.pop %v1043
  %v1045 = vadd.f32 %v1044, 1.0
  %v1046 = vrcp.pop %v1045
  %v1047 = vmul.f32 1.0, %v1046
  %1048 = vst [vmem:[%s11] sm:$0x1] %v1047
  // Predicated region
  $region46: #{dnn_model2_forward.1} parent=0 // pred_check
    _
  $region47: #{dnn_model2_forward.1} parent=0 // pred_check_branch
    %1050 = sbr.rel (0) target = $region49
  $region48: #{dnn_model2_forward.1} parent=0 // pred_region
    _
  $region49: #{dnn_model2_forward.1} parent=0 // pred_fallthru
    _
  // Predicated region
  $region50: #{dnn_model2_forward.1} parent=0 // pred_check
    _
  $region51: #{dnn_model2_forward.1} parent=0 // pred_check_branch
    %1052 = sbr.rel (0) target = $region53
  $region52: #{dnn_model2_forward.1} parent=0 // pred_region
    _
  $region53: #{dnn_model2_forward.1} parent=0 // pred_fallthru
    _

</llo_original>
